<compile_context>
chip_gen: v5e
topology: v5e:2x2
jax: 0.10.0
libtpu: 0.0.40
codegen_flags: <defaults>
</compile_context>

<pallas_src>
import jax
import jax.numpy as jnp
from jax.experimental import pallas as pl
from jax.experimental.pallas import tpu as pltpu

LANE = 128                                # TPU lane width
_VMEM_BUDGET = 24 * 1024 * 1024           # stay well inside 32 MiB scoped limit


def _round_up(x, m):
    return -(-x // m) * m


# ----------------------------------------------------------------------------
# Kernel: one (Co, tm) output tile of  relu( W @ X + b )  (1x1 conv, NCHW).
# ----------------------------------------------------------------------------
def _conv1x1_relu_kernel(x_ref, w_ref, b_ref, o_ref):
    # x_ref: (C, tm) f32 | w_ref: (Co, C) bf16 | b_ref: (Co, 1) f32
    # o_ref: (Co, tm) out_dtype.  Full-K single matmul + fused epilogue.
    x = x_ref[...].astype(jnp.bfloat16)            # fused cast, no extra HBM pass
    y = jnp.dot(w_ref[...], x, preferred_element_type=jnp.float32)
    y = jnp.maximum(y + b_ref[...], 0.0)
    o_ref[...] = y.astype(o_ref.dtype)


# ----------------------------------------------------------------------------
# Wrapper: BasicCov2d.forward  (NCHW in / NCHW out, PyTorch convention).
# ----------------------------------------------------------------------------
def basic_cov2d_forward(x, conv_w, conv_b, *, padding=1, tm=1024,
                        out_dtype=jnp.float32):
    """relu(Conv2d(C, Co, kernel_size=1, stride=1, padding=padding)(x))."""
    N, C, H, W = x.shape
    Co, Ci, kh, kw = conv_w.shape
    assert Ci == C, (conv_w.shape, x.shape)
    # TODO(synk): only kernel_size=1 / stride=1 (the module defaults) have a
    # Pallas path; kernel_size > 1 would need an im2col stage in front.
    assert (kh, kw) == (1, 1), "only the 1x1 / stride-1 fast path is implemented"

    Hp, Wp = H + 2 * padding, W + 2 * padding
    Msp = Hp * Wp

    # Spatial zero-pad directly in NCHW and flatten spatial -> (N, C, Msp).
    # No NCHW<->NHWC transposes anywhere; the kernel output is already NCHW.
    xf = jnp.pad(x, ((0, 0), (0, 0), (padding, padding), (padding, padding))
                 ).reshape(N, C, Msp)

    # ---- tile-size selection (lane-dense, VMEM-budgeted) --------------------
    out_isz = jnp.dtype(out_dtype).itemsize
    msp128 = _round_up(Msp, LANE)
    tm_eff = min(_round_up(tm, LANE), msp128)

    def vmem_bytes(t):
        # double-buffered x / out tiles + resident weight + bias
        return (2 * t * C * 4 + 2 * t * Co * out_isz
                + 2 * Co * C * 2 + 2 * Co * 4)

    while vmem_bytes(tm_eff) > _VMEM_BUDGET and tm_eff > LANE:
        tm_eff = max(LANE, _round_up(tm_eff // 2, LANE))
    assert vmem_bytes(tm_eff) <= _VMEM_BUDGET, "out_channels too large for one tile"

    # Keep >= 2 parallel grid steps when there is enough work (v7x has two
    # TensorCores sharing "parallel" grid axes).
    if N * pl.cdiv(msp128, tm_eff) < 2 and msp128 >= 2 * LANE:
        tm_eff = _round_up(msp128 // 2, LANE)

    m_pad = _round_up(Msp, tm_eff)
    if m_pad != Msp:          # padded pixels just produce relu(bias); sliced off
        xf = jnp.pad(xf, ((0, 0), (0, 0), (0, m_pad - Msp)))

    w2d = conv_w.reshape(Co, C).astype(jnp.bfloat16)      # tiny, VMEM-resident
    b2d = conv_b.reshape(Co, 1).astype(jnp.float32)

    out = pl.pallas_call(
        _conv1x1_relu_kernel,
        out_shape=jax.ShapeDtypeStruct((N, Co, m_pad), out_dtype),
        grid_spec=pltpu.PrefetchScalarGridSpec(
            num_scalar_prefetch=0,
            grid=(N, m_pad // tm_eff),
            in_specs=[
                pl.BlockSpec((None, C, tm_eff), lambda n, i: (n, 0, i)),  # x tile
                pl.BlockSpec((Co, C), lambda n, i: (0, 0)),               # weight
                pl.BlockSpec((Co, 1), lambda n, i: (0, 0)),               # bias
            ],
            out_specs=pl.BlockSpec((None, Co, tm_eff), lambda n, i: (n, 0, i)),
        ),
        compiler_params=pltpu.CompilerParams(
            dimension_semantics=("parallel", "parallel"),
            vmem_limit_bytes=32 * 1024 * 1024),
    )(xf, w2d, b2d)

    # Drop spatial padding columns; already NCHW — no transpose needed.
    return out[:, :, :Msp].reshape(N, Co, Hp, Wp)


# ----------------------------------------------------------------------------
# Pure-JAX f32 reference (same semantics) for a sanity check.
# ----------------------------------------------------------------------------
def basic_cov2d_reference(x, conv_w, conv_b, *, padding=1):
    Co, C = conv_w.shape[0], conv_w.shape[1]
    xp = jnp.pad(x, ((0, 0), (0, 0), (padding, padding), (padding, padding)))
    y = jnp.einsum("nchw,oc->nohw", xp, conv_w.reshape(Co, C),
                   precision=jax.lax.Precision.HIGHEST)
    return jnp.maximum(y + conv_b[None, :, None, None], 0.0)


if __name__ == "__main__":
    key = jax.random.PRNGKey(0)
    kx, kw, kb = jax.random.split(key, 3)

    # Small shapes consistent with the module as used in GoogLeNet's aux head:
    # BasicCov2d(in_channels=4, out_channels=128, kernel_size=1, padding=1).
    N, C, H, W = 2, 4, 16, 16
    Co = 128
    x = jax.random.normal(kx, (N, C, H, W), jnp.float32)
    conv_w = jax.random.normal(kw, (Co, C, 1, 1), jnp.float32) * 0.5
    conv_b = jax.random.normal(kb, (Co,), jnp.float32) * 0.1

    out = jax.block_until_ready(basic_cov2d_forward(x, conv_w, conv_b))
    ref = jax.block_until_ready(basic_cov2d_reference(x, conv_w, conv_b))

    assert out.shape == (N, Co, H + 2, W + 2), out.shape
    max_err = float(jnp.max(jnp.abs(out - ref)))
    max_ref = float(jnp.max(jnp.abs(ref)))
    # bf16 matmul operands with f32 accumulation + f32 epilogue (C=4 contraction).
    assert max_err <= 2e-2 * (1.0 + max_ref), (max_err, max_ref)
    print("KERNEL_OK")
</pallas_src>

<mosaic_0001>
module attributes {stable_mosaic.version = 11 : i64} {
  func.func @_conv1x1_relu_kernel(%arg0: i32, %arg1: i32, %arg2: memref<1x4x384xf32, #tpu.memory_space<vmem>>, %arg3: memref<128x4xbf16, #tpu.memory_space<vmem>>, %arg4: memref<128x1xf32, #tpu.memory_space<vmem>>, %arg5: memref<1x128x384xf32, #tpu.memory_space<vmem>>) attributes {dimension_semantics = [#tpu.dimension_semantics<parallel>, #tpu.dimension_semantics<parallel>], iteration_bounds = array<i64: 2, 1>, scalar_prefetch = 0 : i64, scratch_operands = 0 : i64, tpu.core_type = #tpu.core_type<tc>, window_params = [{transform_indices = @transform_0, window_bounds = array<i64: 1, 4, 384>}, {pipeline_mode = #tpu.pipeline_mode<synchronous>, transform_indices = @transform_1, window_bounds = array<i64: 128, 4>}, {pipeline_mode = #tpu.pipeline_mode<synchronous>, transform_indices = @transform_2, window_bounds = array<i64: 128, 1>}, {transform_indices = @transform_3, window_bounds = array<i64: 1, 128, 384>}]} {
    %c0 = arith.constant 0 : index
    %c0_0 = arith.constant 0 : index
    %c0_1 = arith.constant 0 : index
    %0 = vector.load %arg2[%c0, %c0_0, %c0_1] : memref<1x4x384xf32, #tpu.memory_space<vmem>>, vector<1x4x384xf32>
    %1 = vector.shape_cast %0 : vector<1x4x384xf32> to vector<4x384xf32>
    %2 = arith.truncf %1 : vector<4x384xf32> to vector<4x384xbf16>
    %c0_2 = arith.constant 0 : index
    %c0_3 = arith.constant 0 : index
    %3 = vector.load %arg3[%c0_2, %c0_3] : memref<128x4xbf16, #tpu.memory_space<vmem>>, vector<128x4xbf16>
    %cst = arith.constant dense<0.000000e+00> : vector<128x384xf32>
    %4 = tpu.matmul %3, %2, %cst {dimension_numbers = #tpu.dot_dimension_numbers<[1], [0], [0], [1], [0, 0, 1, 1], [], []>} : vector<128x4xbf16>, vector<4x384xbf16>, vector<128x384xf32> -> vector<128x384xf32>
    %c0_4 = arith.constant 0 : index
    %c0_5 = arith.constant 0 : index
    %5 = vector.load %arg4[%c0_4, %c0_5] : memref<128x1xf32, #tpu.memory_space<vmem>>, vector<128x1xf32>
    %6 = vector.broadcast %5 : vector<128x1xf32> to vector<128x384xf32>
    %7 = arith.addf %4, %6 : vector<128x384xf32>
    %cst_6 = arith.constant 0.000000e+00 : f32
    %8 = vector.broadcast %cst_6 : f32 to vector<128x384xf32>
    %9 = arith.maximumf %7, %8 : vector<128x384xf32>
    %c0_7 = arith.constant 0 : index
    %c0_8 = arith.constant 0 : index
    %c0_9 = arith.constant 0 : index
    %10 = vector.load %arg5[%c0_7, %c0_8, %c0_9] : memref<1x128x384xf32, #tpu.memory_space<vmem>>, vector<1x128x384xf32>
    %11 = vector.shape_cast %10 : vector<1x128x384xf32> to vector<128x384xf32>
    %12 = vector.shape_cast %9 : vector<128x384xf32> to vector<1x128x384xf32>
    tpu.vector_store %arg5[%c0_7, %c0_8, %c0_9], %12 {strides = array<i32>} : memref<1x128x384xf32, #tpu.memory_space<vmem>>, vector<1x128x384xf32>,
    return
  }
  func.func @transform_0(%arg0: i32, %arg1: i32) -> (i32, i32, i32) {
    %c0_i32 = arith.constant 0 : i32
    %c0_i32_0 = arith.constant 0 : i32
    return %arg0, %c0_i32, %arg1 : i32, i32, i32
  }
  func.func @transform_1(%arg0: i32, %arg1: i32) -> (i32, i32) {
    %c0_i32 = arith.constant 0 : i32
    %c0_i32_0 = arith.constant 0 : i32
    %c0_i32_1 = arith.constant 0 : i32
    return %c0_i32, %c0_i32_0 : i32, i32
  }
  func.func @transform_2(%arg0: i32, %arg1: i32) -> (i32, i32) {
    %c0_i32 = arith.constant 0 : i32
    %c0_i32_0 = arith.constant 0 : i32
    %c0_i32_1 = arith.constant 0 : i32
    return %c0_i32, %c0_i32_0 : i32, i32
  }
  func.func @transform_3(%arg0: i32, %arg1: i32) -> (i32, i32, i32) {
    %c0_i32 = arith.constant 0 : i32
    %c0_i32_0 = arith.constant 0 : i32
    return %arg0, %c0_i32, %arg1 : i32, i32, i32
  }
}

</mosaic_0001>

<llo_original>
// kernel: tpu_custom_call.1
$region0: #{tpu_custom_call.1}
  #allocation0 [shape = 'u32[]', space=smem, size = 0x4, offset = 0x4, fixed_abs, tag = 'smem constant byte address 0x4 - core index']
  #allocation1 [shape = 'u32[72,128]{1,0:T(1,128)}', space=vmem, size = 0x9000, scoped, tag = 'internal scratch']
  %s0 = inlined_call_operand.vmem [shape: f32[2,4,384], index: 0, kind: input, shape index: {}]
  %s1 = inlined_call_operand.vmem [shape: bf16[128,4], index: 1, kind: input, shape index: {}]
  %s2 = inlined_call_operand.vmem [shape: f32[128,1], index: 2, kind: input, shape index: {}]
  %s3 = inlined_call_operand.hbm [shape: f32[2,128,384], index: 3, kind: output, shape index: {}]
  %s4 = sld [smem:[#allocation0]]
  $region45: #{tpu_custom_call.1} parent=0
    _
  %s6 = ssub.s32 1, %s4
  %s7 = scalar_select 0, %s6, %s4
  $region1: #{tpu_custom_call.1} parent=0
    #allocation2 [shape = 'u8[393216]{0}', space=vmem, size = 0x60000, scoped, tag = 'output window, operand 0']
    #allocation3 [shape = 's32[2]{0}', space=sflag, size = 0x8, scoped, tag = 'scoped memory for tpu_custom_call.1']
    %8 = vsyncpa [#allocation3], 0
    %s9 = scalar_lea.sflag [#allocation3], 1
    %10 = vsyncpa %s9, 0
    loop: start=0, step=1, limit=4
    $region2: #{tpu_custom_call.1} parent=1 // loop_pre_header
      _
    $region3: #{tpu_custom_call.1} parent=1 // loop_header
      %s12 = sphi 0, %s16
      %p13 = scmp.ge.s32.totalorder %s12, 4
      %s19 = sphi 0, %s31
      %s20 = sphi 0, %s27
      %s21 = sphi 0, %s19
      %s22 = sphi 0, %s20
      %s23 = sphi 0, %s21
      %s24 = sphi 0, %s22
      %s36 = sphi 0, %s38
      %s39 = sphi 0, %s36
      %s40 = sphi 0, %s39
      %s56 = sphi 0, %s40
      %s60 = sphi 0, %s60
      %s62 = sphi 0, %s60
      %s63 = sphi 0, %s62
      %s77 = sphi 0, %s63
      %s81 = sphi 0, %s81
      %s83 = sphi 0, %s81
      %s84 = sphi 0, %s83
      %s98 = sphi 0, %s84
      %s106 = sphi 0, %s108
      %s109 = sphi 0, %s106
      %s110 = sphi 0, %s109
      %s126 = sphi 0, %s110
    $region4: #{tpu_custom_call.1} parent=1 // loop_header_branch
      %15 = sbr.rel (%p13) target = $region8
    $region5: #{tpu_custom_call.1} parent=1 // loop_body
      %s17 = ssub.s32 %s12, 1
      %s18 = ssub.s32 %s12, 2
      %s25 = sadd.s32 1, %s20
      %p26 = scmp.ge.s32.totalorder %s25, 1
      %s27 = scalar_select %p26, 0, %s25
      %s28 = sadd.s32 1, %s19
      %s29 = scalar_select %p26, %s28, %s19
      %p30 = scmp.ge.s32.totalorder %s29, 2
      %s31 = scalar_select %p30, 0, %s29
      %s32 = ssub.s32 %s19, %s31
      %s33 = ssub.s32 %s20, %s27
      %s34 = sor.u32 %s32, %s33
      %p35 = scmp.eq.s32.totalorder %s34, 0
      %s37 = sadd.s32 %s36, 1
      %s38 = scalar_select %p35, %s36, %s37
      %p41 = pneg %p35
      %p42 = scmp.eq.s32.totalorder %s12, 1
      %p43 = por %p41, %p42
      %p44 = scmp.ne.s32.totalorder %s36, %s39
      %p45 = scmp.eq.s32.totalorder %s12, 0
      %p46 = por %p44, %p45
      %p47 = scmp.ne.s32.totalorder %s36, %s39
      %p48 = scmp.eq.s32.totalorder %s17, 1
      %p49 = por %p47, %p48
      %p50 = scmp.ne.s32.totalorder %s39, %s40
      %p51 = scmp.eq.s32.totalorder %s17, 0
      %p52 = por %p50, %p51
      %p53 = scmp.ne.s32.totalorder %s39, %s40
      %p54 = scmp.eq.s32.totalorder %s18, 1
      %p55 = por %p53, %p54
      %p57 = scmp.ne.s32.totalorder %s40, %s56
      %p58 = scmp.eq.s32.totalorder %s18, 0
      %p59 = por %p57, %p58
      %s61 = sadd.s32 %s60, 1
      %p64 = scmp.eq.s32.totalorder %s12, 1
      %p65 = scmp.ne.s32.totalorder %s60, %s62
      %p66 = scmp.eq.s32.totalorder %s12, 0
      %p67 = por %p65, %p66
      %p68 = scmp.ne.s32.totalorder %s60, %s62
      %p69 = scmp.eq.s32.totalorder %s17, 1
      %p70 = por %p68, %p69
      %p71 = scmp.ne.s32.totalorder %s62, %s63
      %p72 = scmp.eq.s32.totalorder %s17, 0
      %p73 = por %p71, %p72
      %p74 = scmp.ne.s32.totalorder %s62, %s63
      %p75 = scmp.eq.s32.totalorder %s18, 1
      %p76 = por %p74, %p75
      %p78 = scmp.ne.s32.totalorder %s63, %s77
      %p79 = scmp.eq.s32.totalorder %s18, 0
      %p80 = por %p78, %p79
      %s82 = sadd.s32 %s81, 1
      %p85 = scmp.eq.s32.totalorder %s12, 1
      %p86 = scmp.ne.s32.totalorder %s81, %s83
      %p87 = scmp.eq.s32.totalorder %s12, 0
      %p88 = por %p86, %p87
      %p89 = scmp.ne.s32.totalorder %s81, %s83
      %p90 = scmp.eq.s32.totalorder %s17, 1
      %p91 = por %p89, %p90
      %p92 = scmp.ne.s32.totalorder %s83, %s84
      %p93 = scmp.eq.s32.totalorder %s17, 0
      %p94 = por %p92, %p93
      %p95 = scmp.ne.s32.totalorder %s83, %s84
      %p96 = scmp.eq.s32.totalorder %s18, 1
      %p97 = por %p95, %p96
      %p99 = scmp.ne.s32.totalorder %s84, %s98
      %p100 = scmp.eq.s32.totalorder %s18, 0
      %p101 = por %p99, %p100
      %s102 = ssub.s32 %s19, %s31
      %s103 = ssub.s32 %s20, %s27
      %s104 = sor.u32 %s102, %s103
      %p105 = scmp.eq.s32.totalorder %s104, 0
      %s107 = sadd.s32 %s106, 1
      %s108 = scalar_select %p105, %s106, %s107
      %p111 = pneg %p105
      %p112 = scmp.eq.s32.totalorder %s12, 1
      %p113 = por %p111, %p112
      %p114 = scmp.ne.s32.totalorder %s106, %s109
      %p115 = scmp.eq.s32.totalorder %s12, 0
      %p116 = por %p114, %p115
      %p117 = scmp.ne.s32.totalorder %s106, %s109
      %p118 = scmp.eq.s32.totalorder %s17, 1
      %p119 = por %p117, %p118
      %p120 = scmp.ne.s32.totalorder %s109, %s110
      %p121 = scmp.eq.s32.totalorder %s17, 0
      %p122 = por %p120, %p121
      %p123 = scmp.ne.s32.totalorder %s109, %s110
      %p124 = scmp.eq.s32.totalorder %s18, 1
      %p125 = por %p123, %p124
      %p127 = scmp.ne.s32.totalorder %s110, %s126
      %p128 = scmp.eq.s32.totalorder %s18, 0
      %p129 = por %p127, %p128
      %p130 = scmp.le.s32.totalorder 1, %s12
      %p131 = scmp.lt.s32.totalorder %s12, 3
      %p132 = pnand %p130, %p131
      %p133 = pneg %p132
      // Predicated region
      $region9: #{tpu_custom_call.1} parent=5 // pred_check
        _
      $region10: #{tpu_custom_call.1} parent=5 // pred_check_branch
        %135 = sbr.rel (%p132) target = $region12
      $region11: #{tpu_custom_call.1} parent=5 // pred_region
        %s136 = ssub.s32 %s12, 1
        // Predicated region
        $region13: #{tpu_custom_call.1} parent=11 // pred_check
          %p137 = pneg %p73
        $region14: #{tpu_custom_call.1} parent=11 // pred_check_branch
          %139 = sbr.rel (%p137) target = $region16
        $region15: #{tpu_custom_call.1} parent=11 // pred_region
          _
        $region16: #{tpu_custom_call.1} parent=11 // pred_fallthru
          _
        // Predicated region
        $region17: #{tpu_custom_call.1} parent=11 // pred_check
          %p140 = pneg %p94
        $region18: #{tpu_custom_call.1} parent=11 // pred_check_branch
          %142 = sbr.rel (%p140) target = $region20
        $region19: #{tpu_custom_call.1} parent=11 // pred_region
          _
        $region20: #{tpu_custom_call.1} parent=11 // pred_fallthru
          _
      $region12: #{tpu_custom_call.1} parent=5 // pred_fallthru
        _
      %p143 = scmp.lt.s32.totalorder %s12, 2
      // Predicated region
      $region21: #{tpu_custom_call.1} parent=5 // pred_check
        %p144 = pneg %p143
      $region22: #{tpu_custom_call.1} parent=5 // pred_check_branch
        %146 = sbr.rel (%p144) target = $region24
      $region23: #{tpu_custom_call.1} parent=5 // pred_region
        // Predicated region
        $region25: #{tpu_custom_call.1} parent=23 // pred_check
          %p147 = pneg %p46
        $region26: #{tpu_custom_call.1} parent=23 // pred_check_branch
          %149 = sbr.rel (%p147) target = $region28
        $region27: #{tpu_custom_call.1} parent=23 // pred_region
          %s150 = smul.u32 3, %s20
          %p151 = scmp.lt.s32.totalorder %s19, 1
          %s152 = scalar_select %p151, %s19, 1
          %p153 = scmp.lt.s32.totalorder %s150, 2
          %s154 = scalar_select %p153, %s150, 2
          %s155 = smul.addr %s152, 3
          %s156 = sadd.s32 %s154, %s155
          %s157 = smul.addr %s156, 4
          %s158 = scalar_lea.vmem %s0, %s157
          %s159 = smul.u32 3, %s20
        $region28: #{tpu_custom_call.1} parent=23 // pred_fallthru
          _
      $region24: #{tpu_custom_call.1} parent=5 // pred_fallthru
        _
      %p160 = scmp.le.s32.totalorder 1, %s12
      %p161 = scmp.lt.s32.totalorder %s12, 3
      %p162 = pnand %p160, %p161
      %p163 = pneg %p162
      // Predicated region
      $region29: #{tpu_custom_call.1} parent=5 // pred_check
        _
      $region30: #{tpu_custom_call.1} parent=5 // pred_check_branch
        %165 = sbr.rel (%p162) target = $region32
      $region31: #{tpu_custom_call.1} parent=5 // pred_region
        %s166 = ssub.s32 %s12, 1
        %s167 = smul.u32 3, %s22
        %p168 = scmp.lt.s32.totalorder %s21, 1
        %s169 = scalar_select %p168, %s21, 1
        %p170 = scmp.lt.s32.totalorder %s167, 2
        %s171 = scalar_select %p170, %s167, 2
        %s172 = smul.addr %s169, 3
        %s173 = sadd.s32 %s171, %s172
        %s174 = smul.addr %s173, 4
        %s175 = scalar_lea.vmem %s0, %s174
        %p176 = pneg %p52
        %p177 = pneg %p49
        %p178 = pneg %p73
        %p179 = pneg %p70
        %p180 = pneg %p94
        %p181 = pneg %p91
        %p182 = pneg %p122
        %p183 = pneg %p119
        %s184 = sand.u32 %s109, 1
        %s185 = scalar_lea.sflag [#allocation3], %s184
        %s186 = sand.u32 %s109, 1
        %s187 = smul.addr %s186, 384
        %s188 = scalar_lea.vmem [#allocation2], %s187
        %s189 = smul.u32 3, %s22
        %p190 = scmp.lt.s32.totalorder %s21, 1
        %s191 = scalar_select %p190, %s21, 1
        %p192 = scmp.lt.s32.totalorder %s189, 2
        %s193 = scalar_select %p192, %s189, 2
        %s194 = smul.addr %s191, 3
        %s195 = sadd.s32 %s193, %s194
        %s196 = smul.addr %s195, 4
        %s197 = scalar_lea.vmem %s0, %s196
        %s198 = smul.u32 3, %s22
        %s199 = smul.u32 3, %s22
        %v201 = vld [vmem:[%s197] sm:$0xff]
        %v202 = vld [vmem:[%s197 + $0x8] sm:$0xf]
        %205 = vst [vmem:[#allocation1] ss:$2 sm:$0xff] %v201
        %s206 = scalar_lea.vmem [#allocation1], 16
        %207 = vst [vmem:[%s206] ss:$2 sm:$0xff] %v202
        %v208 = vld.sshfl [vmem:[#allocation1] sm:$0xff pattern:$0x75316420]
        %v209 = vld.sshfl [vmem:[#allocation1 + $0x8] sm:$0xff pattern:$0x75316420]
        %v210 = vld.sshfl [vmem:[#allocation1 + $0x10] sm:$0xff pattern:$0x75316420]
        %v214 = vpack.c.bf16 %v208, %v208
        %v215 = vpack.c.bf16 %v209, %v209
        %v216 = vpack.c.bf16 %v210, %v210
        %v217 = vld [vmem:[%s1] sm:$0xf]
        %v218 = vld [vmem:[%s1 + $0x4] sm:$0xf]
        %v219 = vld [vmem:[%s1 + $0x8] sm:$0xf]
        %v220 = vld [vmem:[%s1 + $0xc] sm:$0xf]
        %v221 = vld [vmem:[%s1 + $0x10] sm:$0xf]
        %v222 = vld [vmem:[%s1 + $0x14] sm:$0xf]
        %v223 = vld [vmem:[%s1 + $0x18] sm:$0xf]
        %v224 = vld [vmem:[%s1 + $0x1c] sm:$0xf]
        %v225 = vld [vmem:[%s1 + $0x20] sm:$0xf]
        %v226 = vld [vmem:[%s1 + $0x24] sm:$0xf]
        %v227 = vld [vmem:[%s1 + $0x28] sm:$0xf]
        %v228 = vld [vmem:[%s1 + $0x2c] sm:$0xf]
        %v229 = vld [vmem:[%s1 + $0x30] sm:$0xf]
        %v230 = vld [vmem:[%s1 + $0x34] sm:$0xf]
        %v231 = vld [vmem:[%s1 + $0x38] sm:$0xf]
        %v232 = vld [vmem:[%s1 + $0x3c] sm:$0xf]
        %v233 = vld [vmem:[%s2] sm:$0xff]
        %v234 = vld [vmem:[%s2 + $0x8] sm:$0xff]
        %v235 = vld [vmem:[%s2 + $0x10] sm:$0xff]
        %v236 = vld [vmem:[%s2 + $0x18] sm:$0xff]
        %v237 = vld [vmem:[%s2 + $0x20] sm:$0xff]
        %v238 = vld [vmem:[%s2 + $0x28] sm:$0xff]
        %v239 = vld [vmem:[%s2 + $0x30] sm:$0xff]
        %v240 = vld [vmem:[%s2 + $0x38] sm:$0xff]
        %v241 = vld [vmem:[%s2 + $0x40] sm:$0xff]
        %v242 = vld [vmem:[%s2 + $0x48] sm:$0xff]
        %v243 = vld [vmem:[%s2 + $0x50] sm:$0xff]
        %v244 = vld [vmem:[%s2 + $0x58] sm:$0xff]
        %v245 = vld [vmem:[%s2 + $0x60] sm:$0xff]
        %v246 = vld [vmem:[%s2 + $0x68] sm:$0xff]
        %v247 = vld [vmem:[%s2 + $0x70] sm:$0xff]
        %v248 = vld [vmem:[%s2 + $0x78] sm:$0xff]
        %250 = vset.pattern.permute.xlu0 0
        %251 = vperm.xlu0 %250, %v233
        %v252 = vpop.permute.xlu0 %251
        %255 = vset.pattern.permute.xlu0 0
        %256 = vperm.xlu0 %255, %v234
        %v257 = vpop.permute.xlu0 %256
        %260 = vset.pattern.permute.xlu0 0
        %261 = vperm.xlu0 %260, %v235
        %v262 = vpop.permute.xlu0 %261
        %265 = vset.pattern.permute.xlu0 0
        %266 = vperm.xlu0 %265, %v236
        %v267 = vpop.permute.xlu0 %266
        %270 = vset.pattern.permute.xlu0 0
        %271 = vperm.xlu0 %270, %v237
        %v272 = vpop.permute.xlu0 %271
        %275 = vset.pattern.permute.xlu0 0
        %276 = vperm.xlu0 %275, %v238
        %v277 = vpop.permute.xlu0 %276
        %280 = vset.pattern.permute.xlu0 0
        %281 = vperm.xlu0 %280, %v239
        %v282 = vpop.permute.xlu0 %281
        %285 = vset.pattern.permute.xlu0 0
        %286 = vperm.xlu0 %285, %v240
        %v287 = vpop.permute.xlu0 %286
        %290 = vset.pattern.permute.xlu0 0
        %291 = vperm.xlu0 %290, %v241
        %v292 = vpop.permute.xlu0 %291
        %295 = vset.pattern.permute.xlu0 0
        %296 = vperm.xlu0 %295, %v242
        %v297 = vpop.permute.xlu0 %296
        %300 = vset.pattern.permute.xlu0 0
        %301 = vperm.xlu0 %300, %v243
        %v302 = vpop.permute.xlu0 %301
        %305 = vset.pattern.permute.xlu0 0
        %306 = vperm.xlu0 %305, %v244
        %v307 = vpop.permute.xlu0 %306
        %310 = vset.pattern.permute.xlu0 0
        %311 = vperm.xlu0 %310, %v245
        %v312 = vpop.permute.xlu0 %311
        %315 = vset.pattern.permute.xlu0 0
        %316 = vperm.xlu0 %315, %v246
        %v317 = vpop.permute.xlu0 %316
        %320 = vset.pattern.permute.xlu0 0
        %321 = vperm.xlu0 %320, %v247
        %v322 = vpop.permute.xlu0 %321
        %325 = vset.pattern.permute.xlu0 0
        %326 = vperm.xlu0 %325, %v248
        %v327 = vpop.permute.xlu0 %326
        %v345 = vunpack.c.l.b16 %v217
        %v346 = vunpack.c.l.b16 %v218
        %v347 = vunpack.c.l.b16 %v219
        %v348 = vunpack.c.l.b16 %v220
        %v349 = vunpack.c.l.b16 %v221
        %v350 = vunpack.c.l.b16 %v222
        %v351 = vunpack.c.l.b16 %v223
        %v352 = vunpack.c.l.b16 %v224
        %v353 = vunpack.c.l.b16 %v225
        %v354 = vunpack.c.l.b16 %v226
        %v355 = vunpack.c.l.b16 %v227
        %v356 = vunpack.c.l.b16 %v228
        %v357 = vunpack.c.l.b16 %v229
        %v358 = vunpack.c.l.b16 %v230
        %v359 = vunpack.c.l.b16 %v231
        %v360 = vunpack.c.l.b16 %v232
        %v361 = vpack.c.b16 %v346, %v345
        %v362 = vpack.c.b16 %v348, %v347
        %v363 = vpack.c.b16 %v350, %v349
        %v364 = vpack.c.b16 %v352, %v351
        %v365 = vpack.c.b16 %v354, %v353
        %v366 = vpack.c.b16 %v356, %v355
        %v367 = vpack.c.b16 %v358, %v357
        %v368 = vpack.c.b16 %v360, %v359
        %vm369 = vcmask 31744
        %v371 = vsel %vm369, %v361, 0
        %v374 = vsel %vm369, %v362, 0
        %v377 = vsel %vm369, %v363, 0
        %v380 = vsel %vm369, %v364, 0
        %v383 = vsel %vm369, %v365, 0
        %v386 = vsel %vm369, %v366, 0
        %v389 = vsel %vm369, %v367, 0
        %v392 = vsel %vm369, %v368, 0
        %vm394 = vcmask 1041408
        %v396 = vsel %vm394, %v214, 0
        %v399 = vsel %vm394, %v215, 0
        %v402 = vsel %vm394, %v216, 0
        %404 = vmatpush.bf16.msra.mxu0 0
        %405 = vmatpush.bf16.msra.mxu0 0
        %406 = vmatpush.bf16.msra.mxu0 0
        %407 = vmatpush.bf16.msra.mxu0 0
        %408 = vmatpush.bf16.msra.mxu0 0
        %409 = vmatpush.bf16.msra.mxu0 0
        %410 = vmatpush.bf16.msra.mxu0 0
        %411 = vmatpush.bf16.msra.mxu0 %v396
        %412 = vmatmul.bf16.gmra.mxu0 %v371
        %v413 = vpop.f32.mrf.mxu0
        %v414 = vadd.f32 %v252, %v413
        %v415 = vpop.f32.mrf.mxu0
        %v416 = vadd.f32 %v257, %v415
        %417 = vmatmul.bf16.gmra.mxu0 %v374
        %v418 = vpop.f32.mrf.mxu0
        %v419 = vadd.f32 %v262, %v418
        %v420 = vpop.f32.mrf.mxu0
        %v421 = vadd.f32 %v267, %v420
        %422 = vmatmul.bf16.gmra.mxu0 %v377
        %v423 = vpop.f32.mrf.mxu0
        %v424 = vadd.f32 %v272, %v423
        %v425 = vpop.f32.mrf.mxu0
        %v426 = vadd.f32 %v277, %v425
        %427 = vmatmul.bf16.gmra.mxu0 %v380
        %v428 = vpop.f32.mrf.mxu0
        %v429 = vadd.f32 %v282, %v428
        %v430 = vpop.f32.mrf.mxu0
        %v431 = vadd.f32 %v287, %v430
        %432 = vmatmul.bf16.gmra.mxu0 %v383
        %v433 = vpop.f32.mrf.mxu0
        %v434 = vadd.f32 %v292, %v433
        %v435 = vpop.f32.mrf.mxu0
        %v436 = vadd.f32 %v297, %v435
        %437 = vmatmul.bf16.gmra.mxu0 %v386
        %v438 = vpop.f32.mrf.mxu0
        %v439 = vadd.f32 %v302, %v438
        %v440 = vpop.f32.mrf.mxu0
        %v441 = vadd.f32 %v307, %v440
        %442 = vmatmul.bf16.gmra.mxu0 %v389
        %v443 = vpop.f32.mrf.mxu0
        %v444 = vadd.f32 %v312, %v443
        %v445 = vpop.f32.mrf.mxu0
        %v446 = vadd.f32 %v317, %v445
        %447 = vmatmul.bf16.gmra.mxu0 %v392
        %v448 = vpop.f32.mrf.mxu0
        %v449 = vadd.f32 %v322, %v448
        %v450 = vpop.f32.mrf.mxu0
        %v451 = vadd.f32 %v327, %v450
        %452 = vdwg.mxu0
        %453 = vmatpush.bf16.msra.mxu0 0
        %454 = vmatpush.bf16.msra.mxu0 0
        %455 = vmatpush.bf16.msra.mxu0 0
        %456 = vmatpush.bf16.msra.mxu0 0
        %457 = vmatpush.bf16.msra.mxu0 0
        %458 = vmatpush.bf16.msra.mxu0 0
        %459 = vmatpush.bf16.msra.mxu0 0
        %460 = vmatpush.bf16.msra.mxu0 %v399
        %461 = vmatmul.bf16.gmra.mxu0 %v371
        %v462 = vpop.f32.mrf.mxu0
        %v463 = vadd.f32 %v252, %v462
        %v464 = vpop.f32.mrf.mxu0
        %v465 = vadd.f32 %v257, %v464
        %466 = vmatmul.bf16.gmra.mxu0 %v374
        %v467 = vpop.f32.mrf.mxu0
        %v468 = vadd.f32 %v262, %v467
        %v469 = vpop.f32.mrf.mxu0
        %v470 = vadd.f32 %v267, %v469
        %471 = vmatmul.bf16.gmra.mxu0 %v377
        %v472 = vpop.f32.mrf.mxu0
        %v473 = vadd.f32 %v272, %v472
        %v474 = vpop.f32.mrf.mxu0
        %v475 = vadd.f32 %v277, %v474
        %476 = vmatmul.bf16.gmra.mxu0 %v380
        %v477 = vpop.f32.mrf.mxu0
        %v478 = vadd.f32 %v282, %v477
        %v479 = vpop.f32.mrf.mxu0
        %v480 = vadd.f32 %v287, %v479
        %481 = vmatmul.bf16.gmra.mxu0 %v383
        %v482 = vpop.f32.mrf.mxu0
        %v483 = vadd.f32 %v292, %v482
        %v484 = vpop.f32.mrf.mxu0
        %v485 = vadd.f32 %v297, %v484
        %486 = vmatmul.bf16.gmra.mxu0 %v386
        %v487 = vpop.f32.mrf.mxu0
        %v488 = vadd.f32 %v302, %v487
        %v489 = vpop.f32.mrf.mxu0
        %v490 = vadd.f32 %v307, %v489
        %491 = vmatmul.bf16.gmra.mxu0 %v389
        %v492 = vpop.f32.mrf.mxu0
        %v493 = vadd.f32 %v312, %v492
        %v494 = vpop.f32.mrf.mxu0
        %v495 = vadd.f32 %v317, %v494
        %496 = vmatmul.bf16.gmra.mxu0 %v392
        %v497 = vpop.f32.mrf.mxu0
        %v498 = vadd.f32 %v322, %v497
        %v499 = vpop.f32.mrf.mxu0
        %v500 = vadd.f32 %v327, %v499
        %501 = vdwg.mxu0
        %502 = vmatpush.bf16.msra.mxu0 0
        %503 = vmatpush.bf16.msra.mxu0 0
        %504 = vmatpush.bf16.msra.mxu0 0
        %505 = vmatpush.bf16.msra.mxu0 0
        %506 = vmatpush.bf16.msra.mxu0 0
        %507 = vmatpush.bf16.msra.mxu0 0
        %508 = vmatpush.bf16.msra.mxu0 0
        %509 = vmatpush.bf16.msra.mxu0 %v402
        %510 = vmatmul.bf16.gmra.mxu0 %v371
        %v511 = vpop.f32.mrf.mxu0
        %v512 = vadd.f32 %v252, %v511
        %v513 = vpop.f32.mrf.mxu0
        %v514 = vadd.f32 %v257, %v513
        %515 = vmatmul.bf16.gmra.mxu0 %v374
        %v516 = vpop.f32.mrf.mxu0
        %v517 = vadd.f32 %v262, %v516
        %v518 = vpop.f32.mrf.mxu0
        %v519 = vadd.f32 %v267, %v518
        %520 = vmatmul.bf16.gmra.mxu0 %v377
        %v521 = vpop.f32.mrf.mxu0
        %v522 = vadd.f32 %v272, %v521
        %v523 = vpop.f32.mrf.mxu0
        %v524 = vadd.f32 %v277, %v523
        %525 = vmatmul.bf16.gmra.mxu0 %v380
        %v526 = vpop.f32.mrf.mxu0
        %v527 = vadd.f32 %v282, %v526
        %v528 = vpop.f32.mrf.mxu0
        %v529 = vadd.f32 %v287, %v528
        %530 = vmatmul.bf16.gmra.mxu0 %v383
        %v531 = vpop.f32.mrf.mxu0
        %v532 = vadd.f32 %v292, %v531
        %v533 = vpop.f32.mrf.mxu0
        %v534 = vadd.f32 %v297, %v533
        %535 = vmatmul.bf16.gmra.mxu0 %v386
        %v536 = vpop.f32.mrf.mxu0
        %v537 = vadd.f32 %v302, %v536
        %v538 = vpop.f32.mrf.mxu0
        %v539 = vadd.f32 %v307, %v538
        %540 = vmatmul.bf16.gmra.mxu0 %v389
        %v541 = vpop.f32.mrf.mxu0
        %v542 = vadd.f32 %v312, %v541
        %v543 = vpop.f32.mrf.mxu0
        %v544 = vadd.f32 %v317, %v543
        %545 = vmatmul.bf16.gmra.mxu0 %v392
        %v546 = vpop.f32.mrf.mxu0
        %v547 = vadd.f32 %v322, %v546
        %v548 = vpop.f32.mrf.mxu0
        %v549 = vadd.f32 %v327, %v548
        %550 = vdwg.mxu0
        %v551 = vmax.f32 %v414, 0.0
        %v552 = vmax.f32 %v463, 0.0
        %v553 = vmax.f32 %v512, 0.0
        %v554 = vmax.f32 %v416, 0.0
        %v555 = vmax.f32 %v465, 0.0
        %v556 = vmax.f32 %v514, 0.0
        %v557 = vmax.f32 %v419, 0.0
        %v558 = vmax.f32 %v468, 0.0
        %v559 = vmax.f32 %v517, 0.0
        %v560 = vmax.f32 %v421, 0.0
        %v561 = vmax.f32 %v470, 0.0
        %v562 = vmax.f32 %v519, 0.0
        %v563 = vmax.f32 %v424, 0.0
        %v564 = vmax.f32 %v473, 0.0
        %v565 = vmax.f32 %v522, 0.0
        %v566 = vmax.f32 %v426, 0.0
        %v567 = vmax.f32 %v475, 0.0
        %v568 = vmax.f32 %v524, 0.0
        %v569 = vmax.f32 %v429, 0.0
        %v570 = vmax.f32 %v478, 0.0
        %v571 = vmax.f32 %v527, 0.0
        %v572 = vmax.f32 %v431, 0.0
        %v573 = vmax.f32 %v480, 0.0
        %v574 = vmax.f32 %v529, 0.0
        %v575 = vmax.f32 %v434, 0.0
        %v576 = vmax.f32 %v483, 0.0
        %v577 = vmax.f32 %v532, 0.0
        %v578 = vmax.f32 %v436, 0.0
        %v579 = vmax.f32 %v485, 0.0
        %v580 = vmax.f32 %v534, 0.0
        %v581 = vmax.f32 %v439, 0.0
        %v582 = vmax.f32 %v488, 0.0
        %v583 = vmax.f32 %v537, 0.0
        %v584 = vmax.f32 %v441, 0.0
        %v585 = vmax.f32 %v490, 0.0
        %v586 = vmax.f32 %v539, 0.0
        %v587 = vmax.f32 %v444, 0.0
        %v588 = vmax.f32 %v493, 0.0
        %v589 = vmax.f32 %v542, 0.0
        %v590 = vmax.f32 %v446, 0.0
        %v591 = vmax.f32 %v495, 0.0
        %v592 = vmax.f32 %v544, 0.0
        %v593 = vmax.f32 %v449, 0.0
        %v594 = vmax.f32 %v498, 0.0
        %v595 = vmax.f32 %v547, 0.0
        %v596 = vmax.f32 %v451, 0.0
        %v597 = vmax.f32 %v500, 0.0
        %v598 = vmax.f32 %v549, 0.0
        %599 = vst [vmem:[%s188] sm:$0xff] %v551
        %600 = vst [vmem:[%s188 + $0x8] sm:$0xff] %v552
        %601 = vst [vmem:[%s188 + $0x10] sm:$0xff] %v553
        %602 = vst [vmem:[%s188 + $0x18] sm:$0xff] %v554
        %603 = vst [vmem:[%s188 + $0x20] sm:$0xff] %v555
        %604 = vst [vmem:[%s188 + $0x28] sm:$0xff] %v556
        %605 = vst [vmem:[%s188 + $0x30] sm:$0xff] %v557
        %606 = vst [vmem:[%s188 + $0x38] sm:$0xff] %v558
        %607 = vst [vmem:[%s188 + $0x40] sm:$0xff] %v559
        %608 = vst [vmem:[%s188 + $0x48] sm:$0xff] %v560
        %609 = vst [vmem:[%s188 + $0x50] sm:$0xff] %v561
        %610 = vst [vmem:[%s188 + $0x58] sm:$0xff] %v562
        %611 = vst [vmem:[%s188 + $0x60] sm:$0xff] %v563
        %612 = vst [vmem:[%s188 + $0x68] sm:$0xff] %v564
        %613 = vst [vmem:[%s188 + $0x70] sm:$0xff] %v565
        %614 = vst [vmem:[%s188 + $0x78] sm:$0xff] %v566
        %615 = vst [vmem:[%s188 + $0x80] sm:$0xff] %v567
        %616 = vst [vmem:[%s188 + $0x88] sm:$0xff] %v568
        %617 = vst [vmem:[%s188 + $0x90] sm:$0xff] %v569
        %618 = vst [vmem:[%s188 + $0x98] sm:$0xff] %v570
        %619 = vst [vmem:[%s188 + $0xa0] sm:$0xff] %v571
        %620 = vst [vmem:[%s188 + $0xa8] sm:$0xff] %v572
        %621 = vst [vmem:[%s188 + $0xb0] sm:$0xff] %v573
        %622 = vst [vmem:[%s188 + $0xb8] sm:$0xff] %v574
        %623 = vst [vmem:[%s188 + $0xc0] sm:$0xff] %v575
        %624 = vst [vmem:[%s188 + $0xc8] sm:$0xff] %v576
        %625 = vst [vmem:[%s188 + $0xd0] sm:$0xff] %v577
        %626 = vst [vmem:[%s188 + $0xd8] sm:$0xff] %v578
        %627 = vst [vmem:[%s188 + $0xe0] sm:$0xff] %v579
        %628 = vst [vmem:[%s188 + $0xe8] sm:$0xff] %v580
        %629 = vst [vmem:[%s188 + $0xf0] sm:$0xff] %v581
        %630 = vst [vmem:[%s188 + $0xf8] sm:$0xff] %v582
        %631 = vst [vmem:[%s188 + $0x100] sm:$0xff] %v583
        %632 = vst [vmem:[%s188 + $0x108] sm:$0xff] %v584
        %633 = vst [vmem:[%s188 + $0x110] sm:$0xff] %v585
        %634 = vst [vmem:[%s188 + $0x118] sm:$0xff] %v586
        %635 = vst [vmem:[%s188 + $0x120] sm:$0xff] %v587
        %636 = vst [vmem:[%s188 + $0x128] sm:$0xff] %v588
        %637 = vst [vmem:[%s188 + $0x130] sm:$0xff] %v589
        %638 = vst [vmem:[%s188 + $0x138] sm:$0xff] %v590
        %639 = vst [vmem:[%s188 + $0x140] sm:$0xff] %v591
        %640 = vst [vmem:[%s188 + $0x148] sm:$0xff] %v592
        %641 = vst [vmem:[%s188 + $0x150] sm:$0xff] %v593
        %642 = vst [vmem:[%s188 + $0x158] sm:$0xff] %v594
        %643 = vst [vmem:[%s188 + $0x160] sm:$0xff] %v595
        %644 = vst [vmem:[%s188 + $0x168] sm:$0xff] %v596
        %645 = vst [vmem:[%s188 + $0x170] sm:$0xff] %v597
        %646 = vst [vmem:[%s188 + $0x178] sm:$0xff] %v598
        %s647 = sand.u32 %s109, 1
        %s648 = scalar_lea.sflag [#allocation3], %s647
        %s649 = sand.u32 %s109, 1
        %s650 = smul.addr %s649, 384
        %s651 = scalar_lea.vmem [#allocation2], %s650
        // Predicated region
        $region33: #{tpu_custom_call.1} parent=31 // pred_check
          %p652 = pneg %p119
        $region34: #{tpu_custom_call.1} parent=31 // pred_check_branch
          %654 = sbr.rel (%p652) target = $region36
        $region35: #{tpu_custom_call.1} parent=31 // pred_region
          %s655 = smul.u32 3, %s22
          %657 = vsyncadd %s648, 0
          %s658 = smul.addr %s21, 48
          %s659 = sadd.s32 %s655, %s658
          %s660 = smul.addr %s659, 8
          %s661 = scalar_lea.hbm %s3, %s660
          %s662 = sshll.u32 %s651, 4
          %s663 = int_to_ptr.vmem [resolvable:$true] %s662
          %s664 = sshll.u32 %s661, 4
          %s665 = int_to_ptr.hbm [resolvable:$true] %s664
          %670 = dma.vmem_to_hbm [thread:$0]  %s663, 6144, %s665, %s648, 384, 384, 24
        $region36: #{tpu_custom_call.1} parent=31 // pred_fallthru
          _
      $region32: #{tpu_custom_call.1} parent=5 // pred_fallthru
        _
      %p671 = scmp.le.s32.totalorder 2, %s12
      // Predicated region
      $region37: #{tpu_custom_call.1} parent=5 // pred_check
        %p672 = pneg %p671
      $region38: #{tpu_custom_call.1} parent=5 // pred_check_branch
        %674 = sbr.rel (%p672) target = $region40
      $region39: #{tpu_custom_call.1} parent=5 // pred_region
        %s675 = ssub.s32 %s12, 2
        // Predicated region
        $region41: #{tpu_custom_call.1} parent=39 // pred_check
          %p676 = pneg %p125
        $region42: #{tpu_custom_call.1} parent=39 // pred_check_branch
          %678 = sbr.rel (%p676) target = $region44
        $region43: #{tpu_custom_call.1} parent=39 // pred_region
          %s679 = sand.u32 %s110, 1
          %s680 = scalar_lea.sflag [#allocation3], %s679
          %s681 = sand.u32 %s110, 1
          %s682 = smul.addr %s681, 384
          %s683 = scalar_lea.vmem [#allocation2], %s682
          %685 = dma.done %s680, 6144
        $region44: #{tpu_custom_call.1} parent=39 // pred_fallthru
          _
      $region40: #{tpu_custom_call.1} parent=5 // pred_fallthru
        _
    $region6: #{tpu_custom_call.1} parent=1 // loop_footer
      %s16 = sadd.s32 1, %s12
    $region7: #{tpu_custom_call.1} parent=1 // loop_footer_branch
      %11 = sbr.rel target = $region3
    $region8: #{tpu_custom_call.1} parent=1 // loop_exit
      _
    %686 = vsyncpa [#allocation3], 1
    %s687 = scalar_lea.sflag [#allocation3], 1
    %688 = vsyncpa %s687, 1

</llo_original>
